<compile_context>
chip_gen: v7x
topology: tpu7x:2x2x1
jax: 0.10.0
libtpu: 0.0.40
codegen_flags: <defaults>
</compile_context>

<pallas_src>
import functools
import math

import jax
import jax.numpy as jnp
from jax import lax
from jax.experimental import pallas as pl
from jax.experimental.pallas import tpu as pltpu

_INV_SQRT2 = 1.0 / math.sqrt(2.0)


def _round_up(x, m):
    return (x + m - 1) // m * m


# ---------------------------------------------------------------------------
# Kernels
# ---------------------------------------------------------------------------
def _mlp_kernel_f32out(x_ref, w1_ref, b1_ref, w2_ref, b2_ref, o_ref):
    """float32 output: accumulate fc2 partials directly into o_ref (no scratch).

    x_ref : (bm, feat_p)  bf16     w1_ref: (feat_p, bk) bf16   b1_ref: (1, bk) f32
    w2_ref: (bk, feat_p)  bf16     b2_ref: (1, feat_p)  f32    o_ref : (bm, feat_p) f32
    """
    k = pl.program_id(1)

    # fc1 partial for this hidden tile: bf16 MXU operands, f32 accumulation.
    h = jnp.dot(x_ref[...], w1_ref[...], preferred_element_type=jnp.float32)
    h = h + b1_ref[...]
    # Exact GELU in f32 (matches PyTorch F.gelu default, approximate='none').
    h = 0.5 * h * (1.0 + lax.erf(h * _INV_SQRT2))
    # fc2 partial contribution for this hidden tile.
    part = jnp.dot(h.astype(w2_ref.dtype), w2_ref[...],
                   preferred_element_type=jnp.float32)

    @pl.when(k == 0)
    def _():
        o_ref[...] = part + b2_ref[...]

    @pl.when(k > 0)
    def _():
        o_ref[...] += part


def _mlp_kernel_acc(x_ref, w1_ref, b1_ref, w2_ref, b2_ref, o_ref, acc_ref):
    """Generic output dtype: f32 VMEM accumulator + final downcast."""
    k = pl.program_id(1)

    @pl.when(k == 0)
    def _():
        acc_ref[...] = jnp.zeros_like(acc_ref)

    h = jnp.dot(x_ref[...], w1_ref[...], preferred_element_type=jnp.float32)
    h = h + b1_ref[...]
    h = 0.5 * h * (1.0 + lax.erf(h * _INV_SQRT2))
    acc_ref[...] += jnp.dot(h.astype(w2_ref.dtype), w2_ref[...],
                            preferred_element_type=jnp.float32)

    @pl.when(k == pl.num_programs(1) - 1)
    def _():
        o_ref[...] = (acc_ref[...] + b2_ref[...]).astype(o_ref.dtype)


# ---------------------------------------------------------------------------
# Generation-aware configuration
# ---------------------------------------------------------------------------
def _tpu_generation():
    kind = ""
    try:
        kind = jax.devices()[0].device_kind.lower()
    except Exception:
        pass
    if "v7" in kind:
        return "v7x"
    if "v6" in kind:
        return "v6e"
    if "v5 lite" in kind or "v5lite" in kind or "v5e" in kind:
        return "v5e"
    return "other"


# (block_m, block_k, vmem_limit_bytes, tensorcores per chip)
_GEN_DEFAULTS = {
    "v7x":   (512, 1024, 52 * 2 ** 20, 2),   # 64 MiB physical -> headroom
    "v6e":   (1024, 1024, 100 * 2 ** 20, 1),  # 128 MiB physical
    "v5e":   (512, 1024, 96 * 2 ** 20, 1),    # default scoped VMEM only 16 MiB
    "other": (512, 1024, 64 * 2 ** 20, 1),
}


def _vmem_footprint(bm, bk, feat_p, out_itemsize, use_acc):
    """Approximate double-buffered VMEM working set in bytes."""
    buf = 0
    buf += 2 * bm * feat_p * 2              # x tile (bf16, double-buffered)
    buf += 2 * feat_p * bk * 2              # W1 tile
    buf += 2 * bk * feat_p * 2              # W2 tile
    buf += 2 * bk * 4 + 2 * feat_p * 4      # biases
    buf += 2 * bm * feat_p * out_itemsize   # output tile
    if use_acc:
        buf += bm * feat_p * 4              # f32 accumulator scratch
    buf += bm * bk * 6                      # h (f32) + bf16 cast temporaries
    return buf


def _pick_tiles(M, feat_p, hid_p, block_m, block_k, vmem_budget,
                out_itemsize, use_acc, n_cores):
    """Largest (bm, bk) that fits the VMEM budget; bk always divides hid_p."""
    divisors = [d for d in range(128, hid_p + 1, 128) if hid_p % d == 0]
    bm_cap = _round_up(M, 16)
    if n_cores > 1 and M > 16:
        # Ensure >= 2 M-tiles so the "parallel" axis feeds both TensorCores.
        bm_cap = min(bm_cap, _round_up(pl.cdiv(M, n_cores), 16))
    bm = min(_round_up(block_m, 16), bm_cap)
    budget = 0.9 * vmem_budget              # headroom for Mosaic internals
    while True:
        fitting = [d for d in divisors if d <= block_k and
                   _vmem_footprint(bm, d, feat_p, out_itemsize, use_acc) <= budget]
        if fitting:
            return bm, max(fitting)
        if bm <= 16:
            return 16, 128                  # smallest legal tiles
        bm = max(16, _round_up(bm // 2, 16))


# ---------------------------------------------------------------------------
# Wrapper
# ---------------------------------------------------------------------------
def prepare_params(w1, b1, w2, b2):
    """Pad to lane-dense 128-multiples and cast matmul operands to bf16 ONCE
    (hoisted out of the per-call path). Zero padding is exact through
    fc1 -> GELU -> fc2."""
    features, hidden = w1.shape
    feat_p = _round_up(features, 128)
    hid_p = _round_up(hidden, 128)
    w1_b = w1.astype(jnp.bfloat16)
    w2_b = w2.astype(jnp.bfloat16)
    if (features, hidden) != (feat_p, hid_p):   # skip copies when aligned
        w1_b = jnp.zeros((feat_p, hid_p), jnp.bfloat16).at[:features, :hidden].set(w1_b)
        w2_b = jnp.zeros((hid_p, feat_p), jnp.bfloat16).at[:hidden, :features].set(w2_b)
    b1_p = jnp.zeros((1, hid_p), jnp.float32).at[0, :hidden].set(b1.astype(jnp.float32))
    b2_p = jnp.zeros((1, feat_p), jnp.float32).at[0, :features].set(b2.astype(jnp.float32))
    return {"w1": w1_b, "b1": b1_p, "w2": w2_b, "b2": b2_p, "features": features}


@functools.partial(
    jax.jit,
    static_argnames=("features", "block_m", "block_k", "vmem_budget", "n_cores"))
def _mlp_block_impl(x, w1_p, b1_p, w2_p, b2_p, *, features, block_m, block_k,
                    vmem_budget, n_cores):
    orig_shape = x.shape
    orig_dtype = x.dtype
    feat_p, hid_p = w1_p.shape

    x2d = x.reshape(-1, features)
    M = x2d.shape[0]

    out_f32 = (orig_dtype == jnp.float32)
    out_itemsize = jnp.dtype(orig_dtype).itemsize
    bm, bk = _pick_tiles(M, feat_p, hid_p, block_m, block_k, vmem_budget,
                         out_itemsize, not out_f32, n_cores)

    M_p = _round_up(M, bm)
    # Only the activation is padded/cast per call (cheap; weights are pre-done).
    x_pad = jnp.zeros((M_p, feat_p), jnp.bfloat16).at[:M, :features].set(
        x2d.astype(jnp.bfloat16))

    m_steps = M_p // bm
    k_steps = hid_p // bk

    cost = pl.CostEstimate(
        flops=4 * M_p * feat_p * hid_p,                 # two matmuls
        transcendentals=M_p * hid_p,                    # erf per hidden act
        bytes_accessed=(x_pad.size * 2
                        + m_steps * (w1_p.size * 2 + w2_p.size * 2)
                        + b1_p.size * 4 + b2_p.size * 4
                        + M_p * feat_p * out_itemsize),
    )

    in_specs = [
        pl.BlockSpec((bm, feat_p), lambda i, k: (i, 0)),   # x tile
        pl.BlockSpec((feat_p, bk), lambda i, k: (0, k)),   # W1 tile
        pl.BlockSpec((1, bk), lambda i, k: (0, k)),        # b1 tile
        pl.BlockSpec((bk, feat_p), lambda i, k: (k, 0)),   # W2 tile
        pl.BlockSpec((1, feat_p), lambda i, k: (0, 0)),    # b2 (resident)
    ]
    out_spec = pl.BlockSpec((bm, feat_p), lambda i, k: (i, 0))

    common = dict(
        out_shape=jax.ShapeDtypeStruct((M_p, feat_p), orig_dtype),
        compiler_params=pltpu.CompilerParams(
            dimension_semantics=("parallel", "arbitrary"),
            vmem_limit_bytes=int(vmem_budget)),
        cost_estimate=cost,
    )

    if out_f32:
        out_p = pl.pallas_call(
            _mlp_kernel_f32out,
            grid_spec=pltpu.PrefetchScalarGridSpec(
                num_scalar_prefetch=0, grid=(m_steps, k_steps),
                in_specs=in_specs, out_specs=out_spec),
            **common,
        )(x_pad, w1_p, b1_p, w2_p, b2_p)
    else:
        out_p = pl.pallas_call(
            _mlp_kernel_acc,
            grid_spec=pltpu.PrefetchScalarGridSpec(
                num_scalar_prefetch=0, grid=(m_steps, k_steps),
                in_specs=in_specs, out_specs=out_spec,
                scratch_shapes=[pltpu.VMEM((bm, feat_p), jnp.float32)]),
            **common,
        )(x_pad, w1_p, b1_p, w2_p, b2_p)

    return out_p[:M, :features].reshape(orig_shape)


def mlp_block(x, params, *, block_m=None, block_k=None):
    """Forward pass of MlpBlock: fc2(GELU(fc1(x))). x: (..., features)."""
    gen = _tpu_generation()
    bm_d, bk_d, vmem_budget, n_cores = _GEN_DEFAULTS[gen]
    return _mlp_block_impl(
        x, params["w1"], params["b1"], params["w2"], params["b2"],
        features=int(params["features"]),
        block_m=int(block_m or bm_d), block_k=int(block_k or bk_d),
        vmem_budget=int(vmem_budget), n_cores=int(n_cores))


def init_params(key, features, hidden_dim, dtype=jnp.float32):
    """nn.Linear-style init (uniform +/- 1/sqrt(fan_in)); weights stored
    pre-transposed as (in_features, out_features)."""
    k1, k2, k3, k4 = jax.random.split(key, 4)
    bound1 = 1.0 / math.sqrt(features)
    bound2 = 1.0 / math.sqrt(hidden_dim)
    w1 = jax.random.uniform(k1, (features, hidden_dim), dtype, -bound1, bound1)
    b1 = jax.random.uniform(k2, (hidden_dim,), dtype, -bound1, bound1)
    w2 = jax.random.uniform(k3, (hidden_dim, features), dtype, -bound2, bound2)
    b2 = jax.random.uniform(k4, (features,), dtype, -bound2, bound2)
    return w1, b1, w2, b2


if __name__ == "__main__":
    batch, seq, features, hidden_dim = 2, 8, 4, 32

    key = jax.random.PRNGKey(0)
    kx, kp = jax.random.split(key)
    x = jax.random.normal(kx, (batch, seq, features), dtype=jnp.float32)
    w1, b1, w2, b2 = init_params(kp, features, hidden_dim)

    params = prepare_params(w1, b1, w2, b2)   # pad/cast weights once
    out = mlp_block(x, params)
    out = jax.block_until_ready(out)

    # Pure-JAX f32 reference (tolerance loosened for bf16 MXU operands;
    # in-kernel accumulation is f32).
    ref = jnp.dot(jax.nn.gelu(jnp.dot(x, w1) + b1, approximate=False), w2) + b2
    assert out.shape == x.shape
    assert out.dtype == x.dtype
    assert jnp.allclose(out, ref, atol=2e-2, rtol=2e-2)

    print("KERNEL_OK")
</pallas_src>

<mosaic_0001>
module attributes {stable_mosaic.version = 11 : i64} {
  func.func @_mlp_kernel_f32out(%arg0: i32, %arg1: i32, %arg2: memref<16x128xbf16, #tpu.memory_space<vmem>>, %arg3: memref<128x128xbf16, #tpu.memory_space<vmem>>, %arg4: memref<1x128xf32, #tpu.memory_space<vmem>>, %arg5: memref<128x128xbf16, #tpu.memory_space<vmem>>, %arg6: memref<1x128xf32, #tpu.memory_space<vmem>>, %arg7: memref<16x128xf32, #tpu.memory_space<vmem>>) attributes {dimension_semantics = [#tpu.dimension_semantics<parallel>, #tpu.dimension_semantics<arbitrary>], iteration_bounds = array<i64: 1, 1>, scalar_prefetch = 0 : i64, scratch_operands = 0 : i64, tpu.core_type = #tpu.core_type<tc>, window_params = [{transform_indices = @transform_0, window_bounds = array<i64: 16, 128>}, {transform_indices = @transform_1, window_bounds = array<i64: 128, 128>}, {transform_indices = @transform_2, window_bounds = array<i64: 1, 128>}, {transform_indices = @transform_3, window_bounds = array<i64: 128, 128>}, {pipeline_mode = #tpu.pipeline_mode<synchronous>, transform_indices = @transform_4, window_bounds = array<i64: 1, 128>}, {transform_indices = @transform_5, window_bounds = array<i64: 16, 128>}]} {
    %c0 = arith.constant 0 : index
    %c0_0 = arith.constant 0 : index
    %0 = vector.load %arg2[%c0, %c0_0] : memref<16x128xbf16, #tpu.memory_space<vmem>>, vector<16x128xbf16>
    %c0_1 = arith.constant 0 : index
    %c0_2 = arith.constant 0 : index
    %1 = vector.load %arg3[%c0_1, %c0_2] : memref<128x128xbf16, #tpu.memory_space<vmem>>, vector<128x128xbf16>
    %cst = arith.constant dense<0.000000e+00> : vector<16x128xf32>
    %2 = tpu.matmul %0, %1, %cst {dimension_numbers = #tpu.dot_dimension_numbers<[1], [0], [0], [1], [0, 0, 1, 1], [], []>} : vector<16x128xbf16>, vector<128x128xbf16>, vector<16x128xf32> -> vector<16x128xf32>
    %c0_3 = arith.constant 0 : index
    %c0_4 = arith.constant 0 : index
    %3 = vector.load %arg4[%c0_3, %c0_4] : memref<1x128xf32, #tpu.memory_space<vmem>>, vector<1x128xf32>
    %4 = vector.broadcast %3 : vector<1x128xf32> to vector<16x128xf32>
    %5 = arith.addf %2, %4 : vector<16x128xf32>
    %cst_5 = arith.constant 5.000000e-01 : f32
    %6 = vector.broadcast %cst_5 : f32 to vector<16x128xf32>
    %7 = arith.mulf %6, %5 : vector<16x128xf32>
    %cst_6 = arith.constant 0.707106769 : f32
    %8 = vector.broadcast %cst_6 : f32 to vector<16x128xf32>
    %9 = arith.mulf %5, %8 : vector<16x128xf32>
    %10 = math.erf %9 : vector<16x128xf32>
    %cst_7 = arith.constant 1.000000e+00 : f32
    %11 = vector.broadcast %cst_7 : f32 to vector<16x128xf32>
    %12 = arith.addf %11, %10 : vector<16x128xf32>
    %13 = arith.mulf %7, %12 : vector<16x128xf32>
    %14 = arith.truncf %13 : vector<16x128xf32> to vector<16x128xbf16>
    %c0_8 = arith.constant 0 : index
    %c0_9 = arith.constant 0 : index
    %15 = vector.load %arg5[%c0_8, %c0_9] : memref<128x128xbf16, #tpu.memory_space<vmem>>, vector<128x128xbf16>
    %cst_10 = arith.constant dense<0.000000e+00> : vector<16x128xf32>
    %16 = tpu.matmul %14, %15, %cst_10 {dimension_numbers = #tpu.dot_dimension_numbers<[1], [0], [0], [1], [0, 0, 1, 1], [], []>} : vector<16x128xbf16>, vector<128x128xbf16>, vector<16x128xf32> -> vector<16x128xf32>
    %c0_i32 = arith.constant 0 : i32
    %17 = arith.cmpi eq, %arg1, %c0_i32 : i32
    %18 = arith.extui %17 : i1 to i32
    %c0_i32_11 = arith.constant 0 : i32
    %19 = arith.cmpi ne, %18, %c0_i32_11 : i32
    scf.if %19 {
      %c0_14 = arith.constant 0 : index
      %c0_15 = arith.constant 0 : index
      %23 = vector.load %arg6[%c0_14, %c0_15] : memref<1x128xf32, #tpu.memory_space<vmem>>, vector<1x128xf32>
      %24 = vector.broadcast %23 : vector<1x128xf32> to vector<16x128xf32>
      %25 = arith.addf %16, %24 : vector<16x128xf32>
      %c0_16 = arith.constant 0 : index
      %c0_17 = arith.constant 0 : index
      %26 = vector.load %arg7[%c0_16, %c0_17] : memref<16x128xf32, #tpu.memory_space<vmem>>, vector<16x128xf32>
      tpu.vector_store %arg7[%c0_16, %c0_17], %25 {strides = array<i32>} : memref<16x128xf32, #tpu.memory_space<vmem>>, vector<16x128xf32>,
    } else {
    }
    %c0_i32_12 = arith.constant 0 : i32
    %20 = arith.cmpi sgt, %arg1, %c0_i32_12 : i32
    %21 = arith.extui %20 : i1 to i32
    %c0_i32_13 = arith.constant 0 : i32
    %22 = arith.cmpi ne, %21, %c0_i32_13 : i32
    scf.if %22 {
      %c0_14 = arith.constant 0 : index
      %c0_15 = arith.constant 0 : index
      %23 = vector.load %arg7[%c0_14, %c0_15] : memref<16x128xf32, #tpu.memory_space<vmem>>, vector<16x128xf32>
      %24 = arith.addf %23, %16 : vector<16x128xf32>
      %c0_16 = arith.constant 0 : index
      %c0_17 = arith.constant 0 : index
      %25 = vector.load %arg7[%c0_16, %c0_17] : memref<16x128xf32, #tpu.memory_space<vmem>>, vector<16x128xf32>
      tpu.vector_store %arg7[%c0_16, %c0_17], %24 {strides = array<i32>} : memref<16x128xf32, #tpu.memory_space<vmem>>, vector<16x128xf32>,
    } else {
    }
    return
  }
  func.func @transform_0(%arg0: i32, %arg1: i32) -> (i32, i32) {
    %c0_i32 = arith.constant 0 : i32
    %c0_i32_0 = arith.constant 0 : i32
    return %arg0, %c0_i32 : i32, i32
  }
  func.func @transform_1(%arg0: i32, %arg1: i32) -> (i32, i32) {
    %c0_i32 = arith.constant 0 : i32
    %c0_i32_0 = arith.constant 0 : i32
    return %c0_i32, %arg1 : i32, i32
  }
  func.func @transform_2(%arg0: i32, %arg1: i32) -> (i32, i32) {
    %c0_i32 = arith.constant 0 : i32
    %c0_i32_0 = arith.constant 0 : i32
    return %c0_i32, %arg1 : i32, i32
  }
  func.func @transform_3(%arg0: i32, %arg1: i32) -> (i32, i32) {
    %c0_i32 = arith.constant 0 : i32
    %c0_i32_0 = arith.constant 0 : i32
    return %arg1, %c0_i32 : i32, i32
  }
  func.func @transform_4(%arg0: i32, %arg1: i32) -> (i32, i32) {
    %c0_i32 = arith.constant 0 : i32
    %c0_i32_0 = arith.constant 0 : i32
    %c0_i32_1 = arith.constant 0 : i32
    return %c0_i32, %c0_i32_0 : i32, i32
  }
  func.func @transform_5(%arg0: i32, %arg1: i32) -> (i32, i32) {
    %c0_i32 = arith.constant 0 : i32
    %c0_i32_0 = arith.constant 0 : i32
    return %arg0, %c0_i32 : i32, i32
  }
}

</mosaic_0001>

<llo_original>
// kernel: _mlp_block_impl.1
$region0: #{_mlp_block_impl.1}
  #allocation0 [shape = 'u32[]', space=smem, size = 0x4, offset = 0x4, fixed_abs, tag = 'smem constant byte address 0x4 - core index']
  #allocation1 [shape = 'u32[144,128]{1,0:T(1,128)}', space=vmem, size = 0x12000, scoped, tag = 'internal scratch']
  %s0 = inlined_call_operand.hbm [shape: bf16[16,128], index: 0, kind: input, shape index: {}]
  %s1 = inlined_call_operand.hbm [shape: bf16[128,128], index: 1, kind: input, shape index: {}]
  %s2 = inlined_call_operand.hbm [shape: f32[1,128], index: 2, kind: input, shape index: {}]
  %s3 = inlined_call_operand.hbm [shape: bf16[128,128], index: 3, kind: input, shape index: {}]
  %s4 = inlined_call_operand.hbm [shape: f32[1,128], index: 4, kind: input, shape index: {}]
  %s5 = inlined_call_operand.hbm [shape: f32[16,128], index: 5, kind: output, shape index: {}]
  %s6 = sld [smem:[#allocation0]]
  $region58: #{_mlp_block_impl.1} parent=0
    _
  %s8 = ssub.s32 1, %s6
  %s9 = scalar_select 0, %s8, %s6
  $region1: #{_mlp_block_impl.1} parent=0
    #allocation2 [shape = 'u8[4096]{0}', space=vmem, size = 0x1000, scoped, tag = 'input window, operand 0, single buffered']
    #allocation3 [shape = 's32[1]{0}', space=sflag, size = 0x4, scoped, tag = 'scoped memory for _mlp_block_impl.1']
    #allocation4 [shape = 's32[1]{0}', space=sflag, size = 0x4, scoped, tag = 'scoped memory for _mlp_block_impl.1']
    #allocation5 [shape = 'u8[32768]{0}', space=vmem, size = 0x8000, scoped, tag = 'input window, operand 1, single buffered']
    #allocation6 [shape = 's32[1]{0}', space=sflag, size = 0x4, scoped, tag = 'scoped memory for _mlp_block_impl.1']
    #allocation7 [shape = 'u8[512]{0}', space=vmem, size = 0x400, scoped, tag = 'input window, operand 2, single buffered']
    #allocation8 [shape = 'u8[32768]{0}', space=vmem, size = 0x8000, scoped, tag = 'input window, operand 3, single buffered']
    #allocation9 [shape = 's32[1]{0}', space=sflag, size = 0x4, scoped, tag = 'scoped memory for _mlp_block_impl.1']
    #allocation10 [shape = 'u8[512]{0}', space=vmem, size = 0x400, scoped, tag = 'input window, operand 4, single buffered']
    #allocation11 [shape = 'u8[8192]{0}', space=vmem, size = 0x2000, scoped, tag = 'output window, operand 0, single buffered']
    %10 = vsyncpa [#allocation3], 0
    %11 = vsyncpa [#allocation6], 0
    %12 = vsyncpa [#allocation9], 0
    %13 = vsyncpa [#allocation4], 0
    // Predicated region
    $region2: #{_mlp_block_impl.1} parent=1 // pred_check
      _
    $region3: #{_mlp_block_impl.1} parent=1 // pred_check_branch
      %15 = sbr.rel (0) target = $region5
    $region4: #{_mlp_block_impl.1} parent=1 // pred_region
      %s17 = ssub.s32 128, 128
      %18 = vsyncadd [#allocation3], %s17
      %s19 = sshll.u32 [#allocation2], 4
      %s20 = int_to_ptr.vmem [resolvable:$true] %s19
      %25 = dma.hbm_to_vmem [thread:$0]  %s0, 128, %s20, [#allocation3], 64, 64, 4
    $region5: #{_mlp_block_impl.1} parent=1 // pred_fallthru
      _
    // Predicated region
    $region6: #{_mlp_block_impl.1} parent=1 // pred_check
      _
    $region7: #{_mlp_block_impl.1} parent=1 // pred_check_branch
      %27 = sbr.rel (0) target = $region9
    $region8: #{_mlp_block_impl.1} parent=1 // pred_region
      %s29 = ssub.s32 1024, 1024
      %30 = vsyncadd [#allocation6], %s29
      %s31 = sshll.u32 [#allocation5], 4
      %s32 = int_to_ptr.vmem [resolvable:$true] %s31
      %37 = dma.hbm_to_vmem [thread:$0]  %s1, 1024, %s32, [#allocation6], 64, 64, 4
    $region9: #{_mlp_block_impl.1} parent=1 // pred_fallthru
      _
    // Predicated region
    $region10: #{_mlp_block_impl.1} parent=1 // pred_check
      _
    $region11: #{_mlp_block_impl.1} parent=1 // pred_check_branch
      %39 = sbr.rel (0) target = $region13
    $region12: #{_mlp_block_impl.1} parent=1 // pred_region
      %s41 = ssub.s32 16, 16
      %42 = vsyncadd [#allocation6], %s41
      %s44 = sshll.u32 [#allocation7], 4
      %s45 = int_to_ptr.vmem [resolvable:$true] %s44
      %47 = dma.hbm_to_vmem [thread:$0]  %s2, 16, %s45, [#allocation6]
    $region13: #{_mlp_block_impl.1} parent=1 // pred_fallthru
      _
    // Predicated region
    $region14: #{_mlp_block_impl.1} parent=1 // pred_check
      _
    $region15: #{_mlp_block_impl.1} parent=1 // pred_check_branch
      %49 = sbr.rel (0) target = $region17
    $region16: #{_mlp_block_impl.1} parent=1 // pred_region
      %s51 = ssub.s32 1024, 1024
      %52 = vsyncadd [#allocation9], %s51
      %s53 = sshll.u32 [#allocation8], 4
      %s54 = int_to_ptr.vmem [resolvable:$true] %s53
      %59 = dma.hbm_to_vmem [thread:$0]  %s3, 1024, %s54, [#allocation9], 64, 64, 4
    $region17: #{_mlp_block_impl.1} parent=1 // pred_fallthru
      _
    // Predicated region
    $region18: #{_mlp_block_impl.1} parent=1 // pred_check
      _
    $region19: #{_mlp_block_impl.1} parent=1 // pred_check_branch
      %61 = sbr.rel (0) target = $region21
    $region20: #{_mlp_block_impl.1} parent=1 // pred_region
      %s63 = ssub.s32 16, 16
      %64 = vsyncadd [#allocation9], %s63
      %s66 = sshll.u32 [#allocation10], 4
      %s67 = int_to_ptr.vmem [resolvable:$true] %s66
      %69 = dma.hbm_to_vmem [thread:$0]  %s4, 16, %s67, [#allocation9]
    $region21: #{_mlp_block_impl.1} parent=1 // pred_fallthru
      _
    // Predicated region
    $region22: #{_mlp_block_impl.1} parent=1 // pred_check
      _
    $region23: #{_mlp_block_impl.1} parent=1 // pred_check_branch
      %71 = sbr.rel (0) target = $region25
    $region24: #{_mlp_block_impl.1} parent=1 // pred_region
      %72 = dma.done [#allocation3], 128
    $region25: #{_mlp_block_impl.1} parent=1 // pred_fallthru
      _
    // Predicated region
    $region26: #{_mlp_block_impl.1} parent=1 // pred_check
      _
    $region27: #{_mlp_block_impl.1} parent=1 // pred_check_branch
      %74 = sbr.rel (0) target = $region29
    $region28: #{_mlp_block_impl.1} parent=1 // pred_region
      %75 = dma.done [#allocation6], 1024
    $region29: #{_mlp_block_impl.1} parent=1 // pred_fallthru
      _
    // Predicated region
    $region30: #{_mlp_block_impl.1} parent=1 // pred_check
      _
    $region31: #{_mlp_block_impl.1} parent=1 // pred_check_branch
      %77 = sbr.rel (0) target = $region33
    $region32: #{_mlp_block_impl.1} parent=1 // pred_region
      %78 = dma.done [#allocation6], 16
    $region33: #{_mlp_block_impl.1} parent=1 // pred_fallthru
      _
    // Predicated region
    $region34: #{_mlp_block_impl.1} parent=1 // pred_check
      _
    $region35: #{_mlp_block_impl.1} parent=1 // pred_check_branch
      %80 = sbr.rel (0) target = $region37
    $region36: #{_mlp_block_impl.1} parent=1 // pred_region
      %81 = dma.done [#allocation9], 1024
    $region37: #{_mlp_block_impl.1} parent=1 // pred_fallthru
      _
    // Predicated region
    $region38: #{_mlp_block_impl.1} parent=1 // pred_check
      _
    $region39: #{_mlp_block_impl.1} parent=1 // pred_check_branch
      %83 = sbr.rel (0) target = $region41
    $region40: #{_mlp_block_impl.1} parent=1 // pred_region
      %84 = dma.done [#allocation9], 16
    $region41: #{_mlp_block_impl.1} parent=1 // pred_fallthru
      _
    %v86 = vld [vmem:[#allocation2] sm:$0xf]
    %v87 = vld [vmem:[#allocation2 + $0x4] sm:$0xf]
    %v88 = vld [vmem:[#allocation5] sm:$0xf]
    %v89 = vld [vmem:[#allocation5 + $0x4] sm:$0xf]
    %v90 = vld [vmem:[#allocation5 + $0x8] sm:$0xf]
    %v91 = vld [vmem:[#allocation5 + $0xc] sm:$0xf]
    %v92 = vld [vmem:[#allocation5 + $0x10] sm:$0xf]
    %v93 = vld [vmem:[#allocation5 + $0x14] sm:$0xf]
    %v94 = vld [vmem:[#allocation5 + $0x18] sm:$0xf]
    %v95 = vld [vmem:[#allocation5 + $0x1c] sm:$0xf]
    %v96 = vld [vmem:[#allocation5 + $0x20] sm:$0xf]
    %v97 = vld [vmem:[#allocation5 + $0x24] sm:$0xf]
    %v98 = vld [vmem:[#allocation5 + $0x28] sm:$0xf]
    %v99 = vld [vmem:[#allocation5 + $0x2c] sm:$0xf]
    %v100 = vld [vmem:[#allocation5 + $0x30] sm:$0xf]
    %v101 = vld [vmem:[#allocation5 + $0x34] sm:$0xf]
    %v102 = vld [vmem:[#allocation5 + $0x38] sm:$0xf]
    %v103 = vld [vmem:[#allocation5 + $0x3c] sm:$0xf]
    %v104 = vld [vmem:[#allocation7] sm:$0x1]
    %v106 = vlaneseq
    %v107 = vshrl.u32 %v106, 7
    %v108 = vsub.s32 0, %v107
    %v109 = vrot.slane %v104, %v108
    %v113 = vunpack.c.l.b16 %v86
    %v114 = vunpack.c.l.b16 %v87
    %v115 = vpack.c.b16 %v114, %v113
    %v133 = vunpack.c.l.b16 %v88
    %v134 = vunpack.c.l.b16 %v89
    %v135 = vunpack.c.l.b16 %v90
    %v136 = vunpack.c.l.b16 %v91
    %v137 = vunpack.c.l.b16 %v92
    %v138 = vunpack.c.l.b16 %v93
    %v139 = vunpack.c.l.b16 %v94
    %v140 = vunpack.c.l.b16 %v95
    %v141 = vunpack.c.l.b16 %v96
    %v142 = vunpack.c.l.b16 %v97
    %v143 = vunpack.c.l.b16 %v98
    %v144 = vunpack.c.l.b16 %v99
    %v145 = vunpack.c.l.b16 %v100
    %v146 = vunpack.c.l.b16 %v101
    %v147 = vunpack.c.l.b16 %v102
    %v148 = vunpack.c.l.b16 %v103
    %v149 = vpack.c.b16 %v134, %v133
    %v150 = vpack.c.b16 %v136, %v135
    %v151 = vpack.c.b16 %v138, %v137
    %v152 = vpack.c.b16 %v140, %v139
    %v153 = vpack.c.b16 %v142, %v141
    %v154 = vpack.c.b16 %v144, %v143
    %v155 = vpack.c.b16 %v146, %v145
    %v156 = vpack.c.b16 %v148, %v147
    %165 = vmatprep.subr.bf16.mxu0 0
    %166 = vmatpush1.bf16.msra.mxu0 %v149
    %167 = vmatprep.subr.bf16.mxu0 0
    %168 = vmatpush1.bf16.msra.mxu0 %v150
    %169 = vmatprep.subr.bf16.mxu0 0
    %170 = vmatpush1.bf16.msra.mxu0 %v151
    %171 = vmatprep.subr.bf16.mxu0 0
    %172 = vmatpush1.bf16.msra.mxu0 %v152
    %173 = vmatprep.subr.bf16.mxu0 0
    %174 = vmatpush1.bf16.msra.mxu0 %v153
    %175 = vmatprep.subr.bf16.mxu0 0
    %176 = vmatpush1.bf16.msra.mxu0 %v154
    %177 = vmatprep.subr.bf16.mxu0 0
    %178 = vmatpush1.bf16.msra.mxu0 %v155
    %179 = vmatprep.subr.bf16.mxu0 0
    %180 = vmatpush1.bf16.msra.mxu0 %v156
    %181 = vmatprep.subr.bf16.mxu0 0
    %182 = vmatpush1.bf16.msra.mxu0 0
    %183 = vmatprep.subr.bf16.mxu0 0
    %184 = vmatpush1.bf16.msra.mxu0 0
    %185 = vmatprep.subr.bf16.mxu0 0
    %186 = vmatpush1.bf16.msra.mxu0 0
    %187 = vmatprep.subr.bf16.mxu0 0
    %188 = vmatpush1.bf16.msra.mxu0 0
    %189 = vmatprep.subr.bf16.mxu0 0
    %190 = vmatpush1.bf16.msra.mxu0 0
    %191 = vmatprep.subr.bf16.mxu0 0
    %192 = vmatpush1.bf16.msra.mxu0 0
    %193 = vmatprep.subr.bf16.mxu0 0
    %194 = vmatpush1.bf16.msra.mxu0 0
    %195 = vmatprep.subr.bf16.mxu0 0
    %196 = vmatpush1.bf16.msra.mxu0 0
    %197 = vmatprep.mubr.bf16.mxu0 0
    %198 = vmatmul.mubr.bf16.gmra.mrb[0].mxu0 %v115
    %v199 = vpop.f32.mrb[0].mxu0
    %v200 = vadd.f32 %v109, %v199
    %v201 = vpop.f32.mrb[0].mxu0
    %v202 = vpop.f32.mrb[0].mxu0
    %v203 = vadd.f32 %v109, %v202
    %v204 = vpop.f32.mrb[0].mxu0
    %205 = vdwg.mxu0
    %v206 = vmul.f32 %v200, 0.5
    %v207 = vmul.f32 %v203, 0.5
    %v208 = vmul.f32 %v200, 0.70710677
    %v209 = vmul.f32 %v203, 0.70710677
    %v210 = verf.f32.pop %v208
    %v211 = verf.f32.pop %v209
    %v212 = vadd.f32 %v210, 1.0
    %v213 = vadd.f32 %v211, 1.0
    %v214 = vmul.f32 %v206, %v212
    %v215 = vmul.f32 %v207, %v213
    %v216 = vpack.c.bf16 %v215, %v214
    %v217 = vld [vmem:[#allocation8] sm:$0xf]
    %v218 = vld [vmem:[#allocation8 + $0x4] sm:$0xf]
    %v219 = vld [vmem:[#allocation8 + $0x8] sm:$0xf]
    %v220 = vld [vmem:[#allocation8 + $0xc] sm:$0xf]
    %v221 = vld [vmem:[#allocation8 + $0x10] sm:$0xf]
    %v222 = vld [vmem:[#allocation8 + $0x14] sm:$0xf]
    %v223 = vld [vmem:[#allocation8 + $0x18] sm:$0xf]
    %v224 = vld [vmem:[#allocation8 + $0x1c] sm:$0xf]
    %v225 = vld [vmem:[#allocation8 + $0x20] sm:$0xf]
    %v226 = vld [vmem:[#allocation8 + $0x24] sm:$0xf]
    %v227 = vld [vmem:[#allocation8 + $0x28] sm:$0xf]
    %v228 = vld [vmem:[#allocation8 + $0x2c] sm:$0xf]
    %v229 = vld [vmem:[#allocation8 + $0x30] sm:$0xf]
    %v230 = vld [vmem:[#allocation8 + $0x34] sm:$0xf]
    %v231 = vld [vmem:[#allocation8 + $0x38] sm:$0xf]
    %v232 = vld [vmem:[#allocation8 + $0x3c] sm:$0xf]
    %v249 = vunpack.c.l.b16 %v217
    %v250 = vunpack.c.l.b16 %v218
    %v251 = vunpack.c.l.b16 %v219
    %v252 = vunpack.c.l.b16 %v220
    %v253 = vunpack.c.l.b16 %v221
    %v254 = vunpack.c.l.b16 %v222
    %v255 = vunpack.c.l.b16 %v223
    %v256 = vunpack.c.l.b16 %v224
    %v257 = vunpack.c.l.b16 %v225
    %v258 = vunpack.c.l.b16 %v226
    %v259 = vunpack.c.l.b16 %v227
    %v260 = vunpack.c.l.b16 %v228
    %v261 = vunpack.c.l.b16 %v229
    %v262 = vunpack.c.l.b16 %v230
    %v263 = vunpack.c.l.b16 %v231
    %v264 = vunpack.c.l.b16 %v232
    %v265 = vpack.c.b16 %v250, %v249
    %v266 = vpack.c.b16 %v252, %v251
    %v267 = vpack.c.b16 %v254, %v253
    %v268 = vpack.c.b16 %v256, %v255
    %v269 = vpack.c.b16 %v258, %v257
    %v270 = vpack.c.b16 %v260, %v259
    %v271 = vpack.c.b16 %v262, %v261
    %v272 = vpack.c.b16 %v264, %v263
    %281 = vmatprep.subr.bf16.mxu0 0
    %282 = vmatpush1.bf16.msra.mxu0 %v265
    %283 = vmatprep.subr.bf16.mxu0 0
    %284 = vmatpush1.bf16.msra.mxu0 %v266
    %285 = vmatprep.subr.bf16.mxu0 0
    %286 = vmatpush1.bf16.msra.mxu0 %v267
    %287 = vmatprep.subr.bf16.mxu0 0
    %288 = vmatpush1.bf16.msra.mxu0 %v268
    %289 = vmatprep.subr.bf16.mxu0 0
    %290 = vmatpush1.bf16.msra.mxu0 %v269
    %291 = vmatprep.subr.bf16.mxu0 0
    %292 = vmatpush1.bf16.msra.mxu0 %v270
    %293 = vmatprep.subr.bf16.mxu0 0
    %294 = vmatpush1.bf16.msra.mxu0 %v271
    %295 = vmatprep.subr.bf16.mxu0 0
    %296 = vmatpush1.bf16.msra.mxu0 %v272
    %297 = vmatprep.subr.bf16.mxu0 0
    %298 = vmatpush1.bf16.msra.mxu0 0
    %299 = vmatprep.subr.bf16.mxu0 0
    %300 = vmatpush1.bf16.msra.mxu0 0
    %301 = vmatprep.subr.bf16.mxu0 0
    %302 = vmatpush1.bf16.msra.mxu0 0
    %303 = vmatprep.subr.bf16.mxu0 0
    %304 = vmatpush1.bf16.msra.mxu0 0
    %305 = vmatprep.subr.bf16.mxu0 0
    %306 = vmatpush1.bf16.msra.mxu0 0
    %307 = vmatprep.subr.bf16.mxu0 0
    %308 = vmatpush1.bf16.msra.mxu0 0
    %309 = vmatprep.subr.bf16.mxu0 0
    %310 = vmatpush1.bf16.msra.mxu0 0
    %311 = vmatprep.subr.bf16.mxu0 0
    %312 = vmatpush1.bf16.msra.mxu0 0
    %313 = vmatprep.mubr.bf16.mxu0 0
    %314 = vmatmul.mubr.bf16.gmra.mrb[0].mxu0 %v216
    %v315 = vpop.f32.mrb[0].mxu0
    %v316 = vadd.f32 0.0, %v315
    %v317 = vpop.f32.mrb[0].mxu0
    %v318 = vpop.f32.mrb[0].mxu0
    %v319 = vadd.f32 0.0, %v318
    %v320 = vpop.f32.mrb[0].mxu0
    %321 = vdwg.mxu0
    %p322 = scmp.eq.s32.totalorder 0, 0
    // Predicated region
    $region42: #{_mlp_block_impl.1} parent=1 // pred_check
      %p323 = pneg %p322
    $region43: #{_mlp_block_impl.1} parent=1 // pred_check_branch
      %325 = sbr.rel (%p323) target = $region45
    $region44: #{_mlp_block_impl.1} parent=1 // pred_region
      %v326 = vld [vmem:[#allocation10] sm:$0x1]
      %v328 = vlaneseq
      %v329 = vshrl.u32 %v328, 7
      %v330 = vsub.s32 0, %v329
      %v331 = vrot.slane %v326, %v330
      %v333 = vadd.f32 %v316, %v331
      %v334 = vadd.f32 %v319, %v331
      %335 = vst [vmem:[#allocation11] sm:$0xff] %v333
      %336 = vst [vmem:[#allocation11 + $0x8] sm:$0xff] %v334
    $region45: #{_mlp_block_impl.1} parent=1 // pred_fallthru
      _
    %p337 = scmp.gt.s32.totalorder 0, 0
    // Predicated region
    $region46: #{_mlp_block_impl.1} parent=1 // pred_check
      %p338 = pneg %p337
    $region47: #{_mlp_block_impl.1} parent=1 // pred_check_branch
      %340 = sbr.rel (%p338) target = $region49
    $region48: #{_mlp_block_impl.1} parent=1 // pred_region
      %v341 = vld [vmem:[#allocation11] sm:$0xff]
      %v342 = vld [vmem:[#allocation11 + $0x8] sm:$0xff]
      %v343 = vadd.f32 %v341, %v316
      %v344 = vadd.f32 %v342, %v319
      %345 = vst [vmem:[#allocation11] sm:$0xff] %v343
      %346 = vst [vmem:[#allocation11 + $0x8] sm:$0xff] %v344
    $region49: #{_mlp_block_impl.1} parent=1 // pred_fallthru
      _
    // Predicated region
    $region50: #{_mlp_block_impl.1} parent=1 // pred_check
      _
    $region51: #{_mlp_block_impl.1} parent=1 // pred_check_branch
      %348 = sbr.rel (0) target = $region53
    $region52: #{_mlp_block_impl.1} parent=1 // pred_region
      %s350 = ssub.s32 256, 256
      %351 = vsyncadd [#allocation4], %s350
      %s352 = sshll.u32 [#allocation11], 4
      %s353 = int_to_ptr.vmem [resolvable:$true] %s352
      %358 = dma.vmem_to_hbm [thread:$0]  %s353, 256, %s5, [#allocation4], 128, 128, 8
    $region53: #{_mlp_block_impl.1} parent=1 // pred_fallthru
      _
    // Predicated region
    $region54: #{_mlp_block_impl.1} parent=1 // pred_check
      _
    $region55: #{_mlp_block_impl.1} parent=1 // pred_check_branch
      %360 = sbr.rel (0) target = $region57
    $region56: #{_mlp_block_impl.1} parent=1 // pred_region
      %361 = dma.done [#allocation4], 256
    $region57: #{_mlp_block_impl.1} parent=1 // pred_fallthru
      _
    %362 = vsyncpa [#allocation3], 1
    %363 = vsyncpa [#allocation6], 1
    %364 = vsyncpa [#allocation9], 1
    %365 = vsyncpa [#allocation4], 1

</llo_original>
